<compile_context>
chip_gen: v6e
topology: v6e:2x2x1
jax: 0.10.0
libtpu: 0.0.40
codegen_flags: <defaults>
</compile_context>

<pallas_src>
import math
import functools

import jax
import jax.numpy as jnp
from jax import lax
from jax.experimental import pallas as pl
from jax.experimental.pallas import tpu as pltpu


# Tile caps for the lane-dense (rows, cols) slab.
_MAX_TILE_ROWS = 512          # multiple of 8 (sublane rule)
_MAX_TILE_COLS = 2048         # multiple of 128 (lane rule)
_VMEM_LIMIT_BYTES = 32 * 1024 * 1024


def make_sinusoidal_pe(max_len, embedding_dim, dtype=jnp.float32):
    """Same buffer as the PyTorch __init__: shape (max_len, 1, embedding_dim)."""
    position = jnp.arange(0, max_len, dtype=jnp.float32)[:, None]
    div_term = jnp.exp(jnp.arange(0, embedding_dim, 2, dtype=jnp.float32)
                       * (-math.log(10000.0) / embedding_dim))
    pe = jnp.zeros((max_len, embedding_dim), dtype=jnp.float32)
    pe = pe.at[:, 0::2].set(jnp.sin(position * div_term))
    pe = pe.at[:, 1::2].set(jnp.cos(position * div_term))
    return pe[:, None, :].astype(dtype)   # unsqueeze(0).transpose(0, 1)


def _choose_tiles(rows, cols):
    tr = rows if rows <= _MAX_TILE_ROWS else _MAX_TILE_ROWS
    if cols % 128 == 0 and cols > _MAX_TILE_COLS:
        tc = _MAX_TILE_COLS
    else:
        # Full extent is always a legal block dim (covers S*D not 128-aligned).
        tc = cols
    return tr, tc


# --------------------------- kernels (lane-dense 2-D) ------------------------

def _pe_add_kernel(x_ref, pe_ref, o_ref):
    # x_ref: (TR, TC); pe_ref: (1, TC) broadcasts over the row (batch) axis.
    o_ref[...] = x_ref[...] + pe_ref[...]


def _pe_add_dropout_kernel(seed_ref, x_ref, pe_ref, o_ref, *,
                           drop_threshold, keep_scale, tile_rows, tile_cols):
    y = x_ref[...] + pe_ref[...]

    # Counter-based RNG: hash the *global* (row, col) coordinate of every
    # element with the seed.  Integer-only VPU work, generated directly on the
    # lane-dense tile shape (every generated bit is useful, no padding lanes),
    # and independent of the tiling / grid decomposition.
    r = (lax.broadcasted_iota(jnp.int32, y.shape, 0)
         + pl.program_id(0) * tile_rows).astype(jnp.uint32)
    c = (lax.broadcasted_iota(jnp.int32, y.shape, 1)
         + pl.program_id(1) * tile_cols).astype(jnp.uint32)
    h = (r * jnp.uint32(0x9E3779B1)
         + c * jnp.uint32(0x85EBCA77)
         + seed_ref[0].astype(jnp.uint32) * jnp.uint32(0xC2B2AE3D)
         + jnp.uint32(0x27D4EB2F))
    # murmur3-style finalizer: cheap xor-shift / multiply avalanche.
    h = h ^ (h >> 16)
    h = h * jnp.uint32(0x7FEB352D)
    h = h ^ (h >> 15)
    h = h * jnp.uint32(0x846CA68B)
    h = h ^ (h >> 16)

    # Integer threshold compare: drop iff h < round(p * 2^32).
    keep = h >= jnp.uint32(drop_threshold)
    scale = jnp.asarray(keep_scale, dtype=y.dtype)
    o_ref[...] = jnp.where(keep, y * scale, jnp.zeros_like(y))


# --------------------------------- wrapper -----------------------------------

def positional_embedding(x, pe, *, p_drop=0.1, apply_dropout=False, seed=0):
    """Forward of PositionalEmbedding: x + pe[:S], then optional inverted dropout.

    x:  (S, B, D)  -- the module's seq-first convention (pe broadcasts over B).
    pe: (max_len, 1, D) buffer from make_sinusoidal_pe.
    """
    S, B, D = x.shape

    # Wrapper-side layout plumbing: present a lane-dense slab to the kernel.
    # (S, B, D) -> (B, S, D) -> (B, S*D); pe becomes a single (1, S*D) row that
    # broadcasts over batch rows inside the kernel (fetched once per col tile).
    x2d = jnp.transpose(x, (1, 0, 2)).reshape(B, S * D)
    # For repeated calls at fixed S this flattened row should be precomputed
    # once (like the registered buffer in the PyTorch module).
    pe2d = pe[:S].reshape(1, S * D).astype(x.dtype)

    rows, cols = B, S * D
    tr, tc = _choose_tiles(rows, cols)
    grid = (pl.cdiv(rows, tr), pl.cdiv(cols, tc))

    out_shape = jax.ShapeDtypeStruct((rows, cols), x.dtype)
    compiler_params = pltpu.CompilerParams(
        dimension_semantics=("parallel", "parallel"),
        vmem_limit_bytes=_VMEM_LIMIT_BYTES,
    )

    p = float(p_drop)
    use_dropout = bool(apply_dropout) and p > 0.0
    if use_dropout and p >= 1.0:
        # nn.Dropout(p=1) zeroes everything; avoid the 1/(1-p) = inf scale.
        return jnp.zeros_like(x)

    if not use_dropout:
        # Eval path: plain grid, no seed / scalar prefetch, pure broadcast add.
        out2d = pl.pallas_call(
            _pe_add_kernel,
            out_shape=out_shape,
            grid=grid,
            in_specs=[
                pl.BlockSpec((tr, tc), lambda i, j: (i, j)),
                pl.BlockSpec((1, tc), lambda i, j: (0, j)),
            ],
            out_specs=pl.BlockSpec((tr, tc), lambda i, j: (i, j)),
            compiler_params=compiler_params,
        )(x2d, pe2d)
    else:
        drop_threshold = min(int(round(p * float(1 << 32))), (1 << 32) - 1)
        kernel = functools.partial(
            _pe_add_dropout_kernel,
            drop_threshold=drop_threshold,
            keep_scale=1.0 / (1.0 - p),
            tile_rows=tr, tile_cols=tc)
        seed_arr = jnp.asarray([seed], dtype=jnp.int32)
        out2d = pl.pallas_call(
            kernel,
            out_shape=out_shape,
            grid_spec=pltpu.PrefetchScalarGridSpec(
                num_scalar_prefetch=1,     # only the dropout variant pays for it
                grid=grid,
                in_specs=[
                    pl.BlockSpec((tr, tc), lambda i, j, s: (i, j)),
                    pl.BlockSpec((1, tc), lambda i, j, s: (0, j)),
                ],
                out_specs=pl.BlockSpec((tr, tc), lambda i, j, s: (i, j)),
            ),
            compiler_params=compiler_params,
        )(seed_arr, x2d, pe2d)

    return jnp.transpose(out2d.reshape(B, S, D), (1, 0, 2))


if __name__ == "__main__":
    # Small shapes consistent with the module forward: (seq, batch, embed).
    seq_len, batch, embed_dim, max_len = 8, 2, 32, 512
    p_drop = 0.1

    key = jax.random.PRNGKey(0)
    x = jax.random.normal(key, (seq_len, batch, embed_dim), dtype=jnp.float32)
    pe = make_sinusoidal_pe(max_len, embed_dim)
    ref = x + pe[:seq_len]

    # Eval-mode forward (dropout is identity) -- must match the reference.
    out = jax.block_until_ready(
        positional_embedding(x, pe, p_drop=p_drop, apply_dropout=False))
    assert out.shape == (seq_len, batch, embed_dim)
    assert jnp.allclose(out, ref, atol=1e-5, rtol=1e-5)

    # Training-mode forward: every element must be either dropped (exactly 0)
    # or kept and scaled by 1/(1-p), and a plausible fraction must be dropped.
    out_tr = jax.block_until_ready(
        positional_embedding(x, pe, p_drop=p_drop, apply_dropout=True, seed=42))
    assert out_tr.shape == (seq_len, batch, embed_dim)
    kept = jnp.isclose(out_tr, ref / (1.0 - p_drop), atol=1e-5, rtol=1e-5)
    dropped = (out_tr == 0.0)
    assert bool(jnp.all(kept | dropped))
    n_drop = int(jnp.sum(jnp.logical_and(dropped, jnp.logical_not(kept))))
    assert 0 < n_drop < out_tr.size // 2

    # Larger case exercising the real multi-step grid: 1024 batch rows of a
    # 256-lane slab -> grid (2, 1) with 512-row lane-dense tiles.
    S2, B2, D2 = 8, 1024, 32
    x2 = jax.random.normal(jax.random.PRNGKey(1), (S2, B2, D2), dtype=jnp.float32)
    pe2 = make_sinusoidal_pe(max_len, D2)
    out2 = jax.block_until_ready(
        positional_embedding(x2, pe2, p_drop=p_drop, apply_dropout=False))
    assert jnp.allclose(out2, x2 + pe2[:S2], atol=1e-5, rtol=1e-5)

    print("KERNEL_OK")
</pallas_src>

<mosaic_0001>
module attributes {stable_mosaic.version = 11 : i64} {
  func.func @_pe_add_kernel(%arg0: i32, %arg1: i32, %arg2: memref<2x256xf32, #tpu.memory_space<vmem>>, %arg3: memref<1x256xf32, #tpu.memory_space<vmem>>, %arg4: memref<2x256xf32, #tpu.memory_space<vmem>>) attributes {dimension_semantics = [#tpu.dimension_semantics<parallel>, #tpu.dimension_semantics<parallel>], iteration_bounds = array<i64: 1, 1>, scalar_prefetch = 0 : i64, scratch_operands = 0 : i64, tpu.core_type = #tpu.core_type<tc>, window_params = [{transform_indices = @transform_0, window_bounds = array<i64: 2, 256>}, {transform_indices = @transform_1, window_bounds = array<i64: 1, 256>}, {transform_indices = @transform_2, window_bounds = array<i64: 2, 256>}]} {
    %c0 = arith.constant 0 : index
    %c0_0 = arith.constant 0 : index
    %0 = vector.load %arg2[%c0, %c0_0] : memref<2x256xf32, #tpu.memory_space<vmem>>, vector<2x256xf32>
    %c0_1 = arith.constant 0 : index
    %c0_2 = arith.constant 0 : index
    %1 = vector.load %arg3[%c0_1, %c0_2] : memref<1x256xf32, #tpu.memory_space<vmem>>, vector<1x256xf32>
    %2 = vector.broadcast %1 : vector<1x256xf32> to vector<2x256xf32>
    %3 = arith.addf %0, %2 : vector<2x256xf32>
    %c0_3 = arith.constant 0 : index
    %c0_4 = arith.constant 0 : index
    %4 = vector.load %arg4[%c0_3, %c0_4] : memref<2x256xf32, #tpu.memory_space<vmem>>, vector<2x256xf32>
    tpu.vector_store %arg4[%c0_3, %c0_4], %3 {strides = array<i32>} : memref<2x256xf32, #tpu.memory_space<vmem>>, vector<2x256xf32>,
    return
  }
  func.func @transform_0(%arg0: i32, %arg1: i32) -> (i32, i32) {
    %c0_i32 = arith.constant 0 : i32
    return %arg0, %arg1 : i32, i32
  }
  func.func @transform_1(%arg0: i32, %arg1: i32) -> (i32, i32) {
    %c0_i32 = arith.constant 0 : i32
    %c0_i32_0 = arith.constant 0 : i32
    return %c0_i32, %arg1 : i32, i32
  }
  func.func @transform_2(%arg0: i32, %arg1: i32) -> (i32, i32) {
    %c0_i32 = arith.constant 0 : i32
    return %arg0, %arg1 : i32, i32
  }
}

</mosaic_0001>

<llo_original>
// kernel: tpu_custom_call.1
$region0: #{tpu_custom_call.1}
  #allocation0 [shape = 'u32[]', space=smem, size = 0x4, offset = 0x4, fixed_abs, tag = 'smem constant byte address 0x4 - core index']
  #allocation1 [shape = 'u32[144,128]{1,0:T(1,128)}', space=vmem, size = 0x12000, scoped, tag = 'internal scratch']
  %s0 = inlined_call_operand.hbm [shape: f32[2,256], index: 0, kind: input, shape index: {}]
  %s1 = inlined_call_operand.hbm [shape: f32[1,256], index: 1, kind: input, shape index: {}]
  %s2 = inlined_call_operand.hbm [shape: f32[2,256], index: 2, kind: output, shape index: {}]
  %s3 = sld [smem:[#allocation0]]
  $region26: #{tpu_custom_call.1} parent=0
    _
  %s5 = ssub.s32 1, %s3
  %s6 = scalar_select 0, %s5, %s3
  $region1: #{tpu_custom_call.1} parent=0
    #allocation2 [shape = 'u8[2048]{0}', space=vmem, size = 0x800, scoped, tag = 'input window, operand 0, single buffered']
    #allocation3 [shape = 's32[1]{0}', space=sflag, size = 0x4, scoped, tag = 'scoped memory for tpu_custom_call.1']
    #allocation4 [shape = 's32[1]{0}', space=sflag, size = 0x4, scoped, tag = 'scoped memory for tpu_custom_call.1']
    #allocation5 [shape = 'u8[1024]{0}', space=vmem, size = 0x400, scoped, tag = 'input window, operand 1, single buffered']
    #allocation6 [shape = 's32[1]{0}', space=sflag, size = 0x4, scoped, tag = 'scoped memory for tpu_custom_call.1']
    #allocation7 [shape = 'u8[2048]{0}', space=vmem, size = 0x800, scoped, tag = 'output window, operand 0, single buffered']
    %7 = vsyncpa [#allocation3], 0
    %8 = vsyncpa [#allocation6], 0
    %9 = vsyncpa [#allocation4], 0
    // Predicated region
    $region2: #{tpu_custom_call.1} parent=1 // pred_check
      _
    $region3: #{tpu_custom_call.1} parent=1 // pred_check_branch
      %11 = sbr.rel (0) target = $region5
    $region4: #{tpu_custom_call.1} parent=1 // pred_region
      %s13 = ssub.s32 64, 64
      %14 = vsyncadd [#allocation3], %s13
      %s16 = sshll.u32 [#allocation2], 4
      %s17 = int_to_ptr.vmem [resolvable:$true] %s16
      %19 = dma.hbm_to_vmem [thread:$0]  %s0, 64, %s17, [#allocation3]
    $region5: #{tpu_custom_call.1} parent=1 // pred_fallthru
      _
    // Predicated region
    $region6: #{tpu_custom_call.1} parent=1 // pred_check
      _
    $region7: #{tpu_custom_call.1} parent=1 // pred_check_branch
      %21 = sbr.rel (0) target = $region9
    $region8: #{tpu_custom_call.1} parent=1 // pred_region
      %s23 = ssub.s32 32, 32
      %24 = vsyncadd [#allocation6], %s23
      %s26 = sshll.u32 [#allocation5], 4
      %s27 = int_to_ptr.vmem [resolvable:$true] %s26
      %29 = dma.hbm_to_vmem [thread:$0]  %s1, 32, %s27, [#allocation6]
    $region9: #{tpu_custom_call.1} parent=1 // pred_fallthru
      _
    // Predicated region
    $region10: #{tpu_custom_call.1} parent=1 // pred_check
      _
    $region11: #{tpu_custom_call.1} parent=1 // pred_check_branch
      %31 = sbr.rel (0) target = $region13
    $region12: #{tpu_custom_call.1} parent=1 // pred_region
      %32 = dma.done [#allocation3], 64
    $region13: #{tpu_custom_call.1} parent=1 // pred_fallthru
      _
    // Predicated region
    $region14: #{tpu_custom_call.1} parent=1 // pred_check
      _
    $region15: #{tpu_custom_call.1} parent=1 // pred_check_branch
      %34 = sbr.rel (0) target = $region17
    $region16: #{tpu_custom_call.1} parent=1 // pred_region
      %35 = dma.done [#allocation6], 32
    $region17: #{tpu_custom_call.1} parent=1 // pred_fallthru
      _
    %v36 = vld [vmem:[#allocation2] sm:$0xf]
    %v37 = vld [vmem:[#allocation5] sm:$0x3]
    %v39 = vlaneseq
    %v40 = vshrl.u32 %v39, 7
    %v41 = vsub.s32 0, %v40
    %v42 = vrot.slane %v37, %v41
    %v43 = vlaneseq
    %v44 = vshrl.u32 %v43, 7
    %v45 = vsub.s32 1, %v44
    %v46 = vrot.slane %v37, %v45
    %v47 = vcombine.low %v42, %v46
    %v49 = vunpack.c.l.s4 1983009808
    %v50 = vunpack.c.0.s8 %v49
    %v51 = vlaneseq
    %v52 = vshrl.u32 %v51, 7
    %v53 = vsub.s32 %v50, %v52
    %v54 = vrot.slane %v47, %v53
    %v56 = vadd.f32 %v36, %v54
    %57 = vst [vmem:[#allocation7] sm:$0xf] %v56
    // Predicated region
    $region18: #{tpu_custom_call.1} parent=1 // pred_check
      _
    $region19: #{tpu_custom_call.1} parent=1 // pred_check_branch
      %59 = sbr.rel (0) target = $region21
    $region20: #{tpu_custom_call.1} parent=1 // pred_region
      %s61 = ssub.s32 64, 64
      %62 = vsyncadd [#allocation4], %s61
      %s64 = sshll.u32 [#allocation7], 4
      %s65 = int_to_ptr.vmem [resolvable:$true] %s64
      %67 = dma.vmem_to_hbm [thread:$0]  %s65, 64, %s2, [#allocation4]
    $region21: #{tpu_custom_call.1} parent=1 // pred_fallthru
      _
    // Predicated region
    $region22: #{tpu_custom_call.1} parent=1 // pred_check
      _
    $region23: #{tpu_custom_call.1} parent=1 // pred_check_branch
      %69 = sbr.rel (0) target = $region25
    $region24: #{tpu_custom_call.1} parent=1 // pred_region
      %70 = dma.done [#allocation4], 64
    $region25: #{tpu_custom_call.1} parent=1 // pred_fallthru
      _
    %71 = vsyncpa [#allocation3], 1
    %72 = vsyncpa [#allocation6], 1
    %73 = vsyncpa [#allocation4], 1

</llo_original>
